<compile_context>
chip_gen: v5e
topology: v5e:2x2
jax: 0.10.0
libtpu: 0.0.40
codegen_flags: <defaults>
</compile_context>

<pallas_src>
import jax
import jax.numpy as jnp
from jax.experimental import pallas as pl
from jax.experimental.pallas import tpu as pltpu


def _rotary_kernel(x_ref, cos_ref, sin_ref, o_ref):
    # x_ref:   (1, tT, H, D)
    # cos_ref: (tT, D//2)   sin_ref: (tT, D//2)
    d2 = cos_ref.shape[-1]

    x = x_ref[...]
    x1 = x[..., :d2]
    x2 = x[..., d2:]

    cos = cos_ref[...][None, :, None, :]   # (1, tT, 1, D//2), broadcast over heads
    sin = sin_ref[...][None, :, None, :]

    # y1 = x1*cos + x2*sin ; y2 = -x1*sin + x2*cos   (same sign convention as the
    # PyTorch module). Write the halves directly -- no concatenate.
    o_ref[:, :, :, :d2] = (x1 * cos + x2 * sin).astype(o_ref.dtype)
    o_ref[:, :, :, d2:] = (x2 * cos - x1 * sin).astype(o_ref.dtype)


def rotary(x, n_embd, n_head, base=10000, target_block_bytes=2 * 1024 * 1024):
    """x: (B, T, H, D) with H == n_head, D == n_embd // n_head."""
    B, T, H, D = x.shape
    assert n_embd % n_head == 0
    head_dim = n_embd // n_head
    assert head_dim % 2 == 0
    assert H == n_head and D == head_dim
    d2 = head_dim // 2

    # --- angle tables (host/XLA side; equivalent to the module's cached buffers) ---
    inv_freq = (1.0 / base) ** (
        jnp.arange(0, head_dim, 2, dtype=jnp.float32) / head_dim
    )
    t = jnp.arange(T, dtype=jnp.float32)
    freqs = jnp.outer(t, inv_freq)          # (T, D//2)
    cos = jnp.cos(freqs)
    sin = jnp.sin(freqs)

    # --- choose a sequence tile: ~target_block_bytes per x block -----------------
    itemsize = jnp.dtype(x.dtype).itemsize
    row_bytes = H * D * itemsize
    tT = max(1, min(T, target_block_bytes // row_bytes))
    if tT >= 8:
        tT = (tT // 8) * 8                  # keep tile row counts nicely aligned

    # --- pad T so the grid divides evenly (tail handled by slicing the result) ---
    num_tiles = pl.cdiv(T, tT)
    Tp = num_tiles * tT
    if Tp != T:
        x_in = jnp.pad(x, ((0, 0), (0, Tp - T), (0, 0), (0, 0)))
        cos_in = jnp.pad(cos, ((0, Tp - T), (0, 0)))
        sin_in = jnp.pad(sin, ((0, Tp - T), (0, 0)))
    else:
        x_in, cos_in, sin_in = x, cos, sin

    grid = (num_tiles, B)                   # seq-tile outermost -> table blocks reused

    out = pl.pallas_call(
        _rotary_kernel,
        out_shape=jax.ShapeDtypeStruct((B, Tp, H, D), x.dtype),
        grid_spec=pltpu.PrefetchScalarGridSpec(
            num_scalar_prefetch=0,
            grid=grid,
            in_specs=[
                pl.BlockSpec((1, tT, H, D), lambda ti, b: (b, ti, 0, 0)),
                pl.BlockSpec((tT, d2), lambda ti, b: (ti, 0)),
                pl.BlockSpec((tT, d2), lambda ti, b: (ti, 0)),
            ],
            out_specs=pl.BlockSpec((1, tT, H, D), lambda ti, b: (b, ti, 0, 0)),
        ),
        compiler_params=pltpu.CompilerParams(
            dimension_semantics=("parallel", "parallel"),
        ),
    )(x_in, cos_in, sin_in)

    if Tp != T:
        out = out[:, :T]
    return out


def _rotary_ref(x, n_embd, n_head, base=10000):
    """Pure-JAX reference mirroring the PyTorch forward."""
    B, T, H, D = x.shape
    head_dim = n_embd // n_head
    inv_freq = (1.0 / base) ** (
        jnp.arange(0, head_dim, 2, dtype=jnp.float32) / head_dim
    )
    t = jnp.arange(T, dtype=jnp.float32)
    freqs = jnp.outer(t, inv_freq)
    cos = jnp.cos(freqs)[None, :, None, :]
    sin = jnp.sin(freqs)[None, :, None, :]
    x1, x2 = x[..., : D // 2], x[..., D // 2:]
    y1 = x1 * cos + x2 * sin
    y2 = x1 * (-sin) + x2 * cos
    return jnp.concatenate([y1, y2], axis=-1).astype(x.dtype)


if __name__ == "__main__":
    n_embd, n_head = 32, 4
    head_dim = n_embd // n_head          # 8
    B, T = 2, 8

    key = jax.random.PRNGKey(0)
    x = jax.random.normal(key, (B, T, n_head, head_dim), dtype=jnp.float32)

    out = rotary(x, n_embd, n_head)
    out = jax.block_until_ready(out)

    ref = _rotary_ref(x, n_embd, n_head)
    assert out.shape == x.shape and out.dtype == x.dtype
    assert jnp.allclose(out, ref, atol=1e-5, rtol=1e-5)

    print("KERNEL_OK")
</pallas_src>

<mosaic_0001>
module attributes {stable_mosaic.version = 11 : i64} {
  func.func @_rotary_kernel(%arg0: i32, %arg1: i32, %arg2: memref<1x8x4x8xf32, #tpu.memory_space<vmem>>, %arg3: memref<8x4xf32, #tpu.memory_space<vmem>>, %arg4: memref<8x4xf32, #tpu.memory_space<vmem>>, %arg5: memref<1x8x4x8xf32, #tpu.memory_space<vmem>>) attributes {dimension_semantics = [#tpu.dimension_semantics<parallel>, #tpu.dimension_semantics<parallel>], iteration_bounds = array<i64: 1, 2>, scalar_prefetch = 0 : i64, scratch_operands = 0 : i64, tpu.core_type = #tpu.core_type<tc>, window_params = [{transform_indices = @transform_0, window_bounds = array<i64: 1, 8, 4, 8>}, {transform_indices = @transform_1, window_bounds = array<i64: 8, 4>}, {transform_indices = @transform_2, window_bounds = array<i64: 8, 4>}, {transform_indices = @transform_3, window_bounds = array<i64: 1, 8, 4, 8>}]} {
    %c0 = arith.constant 0 : index
    %c0_0 = arith.constant 0 : index
    %c0_1 = arith.constant 0 : index
    %c0_2 = arith.constant 0 : index
    %0 = vector.load %arg2[%c0, %c0_0, %c0_1, %c0_2] : memref<1x8x4x8xf32, #tpu.memory_space<vmem>>, vector<1x8x4x8xf32>
    %1 = vector.extract_strided_slice %0 {offsets = [0, 0, 0, 0], sizes = [1, 8, 4, 4], strides = [1, 1, 1, 1]} : vector<1x8x4x8xf32> to vector<1x8x4x4xf32>
    %2 = vector.extract_strided_slice %0 {offsets = [0, 0, 0, 4], sizes = [1, 8, 4, 4], strides = [1, 1, 1, 1]} : vector<1x8x4x8xf32> to vector<1x8x4x4xf32>
    %c0_3 = arith.constant 0 : index
    %c0_4 = arith.constant 0 : index
    %3 = vector.load %arg3[%c0_3, %c0_4] : memref<8x4xf32, #tpu.memory_space<vmem>>, vector<8x4xf32>
    %4 = vector.shape_cast %3 : vector<8x4xf32> to vector<1x8x1x4xf32>
    %c0_5 = arith.constant 0 : index
    %c0_6 = arith.constant 0 : index
    %5 = vector.load %arg4[%c0_5, %c0_6] : memref<8x4xf32, #tpu.memory_space<vmem>>, vector<8x4xf32>
    %6 = vector.shape_cast %5 : vector<8x4xf32> to vector<1x8x1x4xf32>
    %7 = vector.broadcast %4 : vector<1x8x1x4xf32> to vector<1x8x4x4xf32>
    %8 = arith.mulf %1, %7 : vector<1x8x4x4xf32>
    %9 = vector.broadcast %6 : vector<1x8x1x4xf32> to vector<1x8x4x4xf32>
    %10 = arith.mulf %2, %9 : vector<1x8x4x4xf32>
    %11 = arith.addf %8, %10 : vector<1x8x4x4xf32>
    %c0_7 = arith.constant 0 : index
    %c0_8 = arith.constant 0 : index
    %c0_9 = arith.constant 0 : index
    %c0_10 = arith.constant 0 : index
    %12 = vector.load %arg5[%c0_7, %c0_8, %c0_9, %c0_10] : memref<1x8x4x8xf32, #tpu.memory_space<vmem>>, vector<1x8x4x4xf32>
    tpu.vector_store %arg5[%c0_7, %c0_8, %c0_9, %c0_10], %11 {strides = array<i32>} : memref<1x8x4x8xf32, #tpu.memory_space<vmem>>, vector<1x8x4x4xf32>,
    %13 = vector.broadcast %4 : vector<1x8x1x4xf32> to vector<1x8x4x4xf32>
    %14 = arith.mulf %2, %13 : vector<1x8x4x4xf32>
    %15 = vector.broadcast %6 : vector<1x8x1x4xf32> to vector<1x8x4x4xf32>
    %16 = arith.mulf %1, %15 : vector<1x8x4x4xf32>
    %17 = arith.subf %14, %16 : vector<1x8x4x4xf32>
    %c0_11 = arith.constant 0 : index
    %c0_12 = arith.constant 0 : index
    %c0_13 = arith.constant 0 : index
    %c4 = arith.constant 4 : index
    %18 = vector.load %arg5[%c0_11, %c0_12, %c0_13, %c4] : memref<1x8x4x8xf32, #tpu.memory_space<vmem>>, vector<1x8x4x4xf32>
    tpu.vector_store %arg5[%c0_11, %c0_12, %c0_13, %c4], %17 {strides = array<i32>} : memref<1x8x4x8xf32, #tpu.memory_space<vmem>>, vector<1x8x4x4xf32>,
    return
  }
  func.func @transform_0(%arg0: i32, %arg1: i32) -> (i32, i32, i32, i32) {
    %c0_i32 = arith.constant 0 : i32
    %c0_i32_0 = arith.constant 0 : i32
    %c0_i32_1 = arith.constant 0 : i32
    return %arg1, %arg0, %c0_i32, %c0_i32_0 : i32, i32, i32, i32
  }
  func.func @transform_1(%arg0: i32, %arg1: i32) -> (i32, i32) {
    %c0_i32 = arith.constant 0 : i32
    %c0_i32_0 = arith.constant 0 : i32
    return %arg0, %c0_i32 : i32, i32
  }
  func.func @transform_2(%arg0: i32, %arg1: i32) -> (i32, i32) {
    %c0_i32 = arith.constant 0 : i32
    %c0_i32_0 = arith.constant 0 : i32
    return %arg0, %c0_i32 : i32, i32
  }
  func.func @transform_3(%arg0: i32, %arg1: i32) -> (i32, i32, i32, i32) {
    %c0_i32 = arith.constant 0 : i32
    %c0_i32_0 = arith.constant 0 : i32
    %c0_i32_1 = arith.constant 0 : i32
    return %arg1, %arg0, %c0_i32, %c0_i32_0 : i32, i32, i32, i32
  }
}

</mosaic_0001>

<llo_original>
// kernel: tpu_custom_call.1
$region0: #{tpu_custom_call.1}
  #allocation0 [shape = 'u32[]', space=smem, size = 0x4, offset = 0x4, fixed_abs, tag = 'smem constant byte address 0x4 - core index']
  #allocation1 [shape = 'u32[72,128]{1,0:T(1,128)}', space=vmem, size = 0x9000, scoped, tag = 'internal scratch']
  %s0 = inlined_call_operand.hbm [shape: f32[2,8,4,8], index: 0, kind: input, shape index: {}]
  %s1 = inlined_call_operand.vmem [shape: f32[8,4], index: 1, kind: input, shape index: {}]
  %s2 = inlined_call_operand.vmem [shape: f32[8,4], index: 2, kind: input, shape index: {}]
  %s3 = inlined_call_operand.hbm [shape: f32[2,8,4,8], index: 3, kind: output, shape index: {}]
  %s4 = sld [smem:[#allocation0]]
  $region49: #{tpu_custom_call.1} parent=0
    _
  %s6 = ssub.s32 1, %s4
  %s7 = scalar_select 0, %s6, %s4
  $region1: #{tpu_custom_call.1} parent=0
    #allocation2 [shape = 'u8[32768]{0}', space=vmem, size = 0x8000, scoped, tag = 'input window, operand 0']
    #allocation3 [shape = 's32[2]{0}', space=sflag, size = 0x8, scoped, tag = 'scoped memory for tpu_custom_call.1']
    #allocation4 [shape = 's32[2]{0}', space=sflag, size = 0x8, scoped, tag = 'scoped memory for tpu_custom_call.1']
    #allocation5 [shape = 'u8[32768]{0}', space=vmem, size = 0x8000, scoped, tag = 'output window, operand 0']
    %8 = vsyncpa [#allocation3], 0
    %s9 = scalar_lea.sflag [#allocation3], 1
    %10 = vsyncpa %s9, 0
    %11 = vsyncpa [#allocation4], 0
    %s12 = scalar_lea.sflag [#allocation4], 1
    %13 = vsyncpa %s12, 0
    loop: start=0, step=1, limit=4
    $region2: #{tpu_custom_call.1} parent=1 // loop_pre_header
      _
    $region3: #{tpu_custom_call.1} parent=1 // loop_header
      %s15 = sphi 0, %s19
      %p16 = scmp.ge.s32.totalorder %s15, 4
      %s22 = sphi 0, %s34
      %s23 = sphi 0, %s30
      %s24 = sphi 0, %s22
      %s25 = sphi 0, %s23
      %s26 = sphi 0, %s24
      %s27 = sphi 0, %s25
      %s39 = sphi 0, %s41
      %s42 = sphi 0, %s39
      %s43 = sphi 0, %s42
      %s59 = sphi 0, %s43
      %s65 = sphi 0, %s67
      %s68 = sphi 0, %s65
      %s69 = sphi 0, %s68
      %s85 = sphi 0, %s69
      %s91 = sphi 0, %s93
      %s94 = sphi 0, %s91
      %s95 = sphi 0, %s94
      %s111 = sphi 0, %s95
      %s119 = sphi 0, %s121
      %s122 = sphi 0, %s119
      %s123 = sphi 0, %s122
      %s139 = sphi 0, %s123
    $region4: #{tpu_custom_call.1} parent=1 // loop_header_branch
      %18 = sbr.rel (%p16) target = $region8
    $region5: #{tpu_custom_call.1} parent=1 // loop_body
      %s20 = ssub.s32 %s15, 1
      %s21 = ssub.s32 %s15, 2
      %s28 = sadd.s32 1, %s23
      %p29 = scmp.ge.s32.totalorder %s28, 2
      %s30 = scalar_select %p29, 0, %s28
      %s31 = sadd.s32 1, %s22
      %s32 = scalar_select %p29, %s31, %s22
      %p33 = scmp.ge.s32.totalorder %s32, 1
      %s34 = scalar_select %p33, 0, %s32
      %s35 = ssub.s32 %s23, %s30
      %s36 = ssub.s32 %s22, %s34
      %s37 = sor.u32 %s35, %s36
      %p38 = scmp.eq.s32.totalorder %s37, 0
      %s40 = sadd.s32 %s39, 1
      %s41 = scalar_select %p38, %s39, %s40
      %p44 = pneg %p38
      %p45 = scmp.eq.s32.totalorder %s15, 1
      %p46 = por %p44, %p45
      %p47 = scmp.ne.s32.totalorder %s39, %s42
      %p48 = scmp.eq.s32.totalorder %s15, 0
      %p49 = por %p47, %p48
      %p50 = scmp.ne.s32.totalorder %s39, %s42
      %p51 = scmp.eq.s32.totalorder %s20, 1
      %p52 = por %p50, %p51
      %p53 = scmp.ne.s32.totalorder %s42, %s43
      %p54 = scmp.eq.s32.totalorder %s20, 0
      %p55 = por %p53, %p54
      %p56 = scmp.ne.s32.totalorder %s42, %s43
      %p57 = scmp.eq.s32.totalorder %s21, 1
      %p58 = por %p56, %p57
      %p60 = scmp.ne.s32.totalorder %s43, %s59
      %p61 = scmp.eq.s32.totalorder %s21, 0
      %p62 = por %p60, %p61
      %s63 = ssub.s32 %s22, %s34
      %p64 = scmp.eq.s32.totalorder %s63, 0
      %s66 = sadd.s32 %s65, 1
      %s67 = scalar_select %p64, %s65, %s66
      %p70 = pneg %p64
      %p71 = scmp.eq.s32.totalorder %s15, 1
      %p72 = por %p70, %p71
      %p73 = scmp.ne.s32.totalorder %s65, %s68
      %p74 = scmp.eq.s32.totalorder %s15, 0
      %p75 = por %p73, %p74
      %p76 = scmp.ne.s32.totalorder %s65, %s68
      %p77 = scmp.eq.s32.totalorder %s20, 1
      %p78 = por %p76, %p77
      %p79 = scmp.ne.s32.totalorder %s68, %s69
      %p80 = scmp.eq.s32.totalorder %s20, 0
      %p81 = por %p79, %p80
      %p82 = scmp.ne.s32.totalorder %s68, %s69
      %p83 = scmp.eq.s32.totalorder %s21, 1
      %p84 = por %p82, %p83
      %p86 = scmp.ne.s32.totalorder %s69, %s85
      %p87 = scmp.eq.s32.totalorder %s21, 0
      %p88 = por %p86, %p87
      %s89 = ssub.s32 %s22, %s34
      %p90 = scmp.eq.s32.totalorder %s89, 0
      %s92 = sadd.s32 %s91, 1
      %s93 = scalar_select %p90, %s91, %s92
      %p96 = pneg %p90
      %p97 = scmp.eq.s32.totalorder %s15, 1
      %p98 = por %p96, %p97
      %p99 = scmp.ne.s32.totalorder %s91, %s94
      %p100 = scmp.eq.s32.totalorder %s15, 0
      %p101 = por %p99, %p100
      %p102 = scmp.ne.s32.totalorder %s91, %s94
      %p103 = scmp.eq.s32.totalorder %s20, 1
      %p104 = por %p102, %p103
      %p105 = scmp.ne.s32.totalorder %s94, %s95
      %p106 = scmp.eq.s32.totalorder %s20, 0
      %p107 = por %p105, %p106
      %p108 = scmp.ne.s32.totalorder %s94, %s95
      %p109 = scmp.eq.s32.totalorder %s21, 1
      %p110 = por %p108, %p109
      %p112 = scmp.ne.s32.totalorder %s95, %s111
      %p113 = scmp.eq.s32.totalorder %s21, 0
      %p114 = por %p112, %p113
      %s115 = ssub.s32 %s23, %s30
      %s116 = ssub.s32 %s22, %s34
      %s117 = sor.u32 %s115, %s116
      %p118 = scmp.eq.s32.totalorder %s117, 0
      %s120 = sadd.s32 %s119, 1
      %s121 = scalar_select %p118, %s119, %s120
      %p124 = pneg %p118
      %p125 = scmp.eq.s32.totalorder %s15, 1
      %p126 = por %p124, %p125
      %p127 = scmp.ne.s32.totalorder %s119, %s122
      %p128 = scmp.eq.s32.totalorder %s15, 0
      %p129 = por %p127, %p128
      %p130 = scmp.ne.s32.totalorder %s119, %s122
      %p131 = scmp.eq.s32.totalorder %s20, 1
      %p132 = por %p130, %p131
      %p133 = scmp.ne.s32.totalorder %s122, %s123
      %p134 = scmp.eq.s32.totalorder %s20, 0
      %p135 = por %p133, %p134
      %p136 = scmp.ne.s32.totalorder %s122, %s123
      %p137 = scmp.eq.s32.totalorder %s21, 1
      %p138 = por %p136, %p137
      %p140 = scmp.ne.s32.totalorder %s123, %s139
      %p141 = scmp.eq.s32.totalorder %s21, 0
      %p142 = por %p140, %p141
      %p143 = scmp.le.s32.totalorder 1, %s15
      %p144 = scmp.lt.s32.totalorder %s15, 3
      %p145 = pnand %p143, %p144
      %p146 = pneg %p145
      // Predicated region
      $region9: #{tpu_custom_call.1} parent=5 // pred_check
        _
      $region10: #{tpu_custom_call.1} parent=5 // pred_check_branch
        %148 = sbr.rel (%p145) target = $region12
      $region11: #{tpu_custom_call.1} parent=5 // pred_region
        %s149 = ssub.s32 %s15, 1
        // Predicated region
        $region13: #{tpu_custom_call.1} parent=11 // pred_check
          %p150 = pneg %p81
        $region14: #{tpu_custom_call.1} parent=11 // pred_check_branch
          %152 = sbr.rel (%p150) target = $region16
        $region15: #{tpu_custom_call.1} parent=11 // pred_region
          %p153 = scmp.lt.s32.totalorder %s24, 0
          %s154 = scalar_select %p153, %s24, 0
          %s155 = smul.addr %s154, 8
          %s156 = scalar_lea.vmem %s1, %s155
        $region16: #{tpu_custom_call.1} parent=11 // pred_fallthru
          _
        // Predicated region
        $region17: #{tpu_custom_call.1} parent=11 // pred_check
          %p157 = pneg %p107
        $region18: #{tpu_custom_call.1} parent=11 // pred_check_branch
          %159 = sbr.rel (%p157) target = $region20
        $region19: #{tpu_custom_call.1} parent=11 // pred_region
          %p160 = scmp.lt.s32.totalorder %s24, 0
          %s161 = scalar_select %p160, %s24, 0
          %s162 = smul.addr %s161, 8
          %s163 = scalar_lea.vmem %s2, %s162
        $region20: #{tpu_custom_call.1} parent=11 // pred_fallthru
          _
      $region12: #{tpu_custom_call.1} parent=5 // pred_fallthru
        _
      %p164 = scmp.lt.s32.totalorder %s15, 2
      // Predicated region
      $region21: #{tpu_custom_call.1} parent=5 // pred_check
        %p165 = pneg %p164
      $region22: #{tpu_custom_call.1} parent=5 // pred_check_branch
        %167 = sbr.rel (%p165) target = $region24
      $region23: #{tpu_custom_call.1} parent=5 // pred_region
        // Predicated region
        $region25: #{tpu_custom_call.1} parent=23 // pred_check
          %p168 = pneg %p49
        $region26: #{tpu_custom_call.1} parent=23 // pred_check_branch
          %170 = sbr.rel (%p168) target = $region28
        $region27: #{tpu_custom_call.1} parent=23 // pred_region
          %s171 = sand.u32 %s39, 1
          %s172 = scalar_lea.sflag [#allocation3], %s171
          %s173 = sand.u32 %s39, 1
          %s174 = smul.addr %s173, 32
          %s175 = scalar_lea.vmem [#allocation2], %s174
          %s176 = smul.u32 8, %s22
          %178 = vsyncadd %s172, 0
          %s179 = smul.addr %s23, 8
          %s180 = sadd.s32 %s176, %s179
          %s181 = smul.addr %s180, 4
          %s182 = scalar_lea.hbm %s0, %s181
          %s183 = sshll.u32 %s182, 4
          %s184 = int_to_ptr.hbm [resolvable:$true] %s183
          %s185 = sshll.u32 %s175, 4
          %s186 = int_to_ptr.vmem [resolvable:$true] %s185
          %191 = dma.hbm_to_vmem [thread:$0]  %s184, 512, %s186, %s172, 64, 64, 4
        $region28: #{tpu_custom_call.1} parent=23 // pred_fallthru
          _
      $region24: #{tpu_custom_call.1} parent=5 // pred_fallthru
        _
      %p192 = scmp.le.s32.totalorder 1, %s15
      %p193 = scmp.lt.s32.totalorder %s15, 3
      %p194 = pnand %p192, %p193
      %p195 = pneg %p194
      // Predicated region
      $region29: #{tpu_custom_call.1} parent=5 // pred_check
        _
      $region30: #{tpu_custom_call.1} parent=5 // pred_check_branch
        %197 = sbr.rel (%p194) target = $region32
      $region31: #{tpu_custom_call.1} parent=5 // pred_region
        %s198 = ssub.s32 %s15, 1
        %s199 = sand.u32 %s42, 1
        %s200 = scalar_lea.sflag [#allocation3], %s199
        %s201 = sand.u32 %s42, 1
        %s202 = smul.addr %s201, 32
        %s203 = scalar_lea.vmem [#allocation2], %s202
        // Predicated region
        $region33: #{tpu_custom_call.1} parent=31 // pred_check
          %p204 = pneg %p55
        $region34: #{tpu_custom_call.1} parent=31 // pred_check_branch
          %206 = sbr.rel (%p204) target = $region36
        $region35: #{tpu_custom_call.1} parent=31 // pred_region
          %208 = dma.done %s200, 512
        $region36: #{tpu_custom_call.1} parent=31 // pred_fallthru
          _
        %s209 = sand.u32 %s42, 1
        %s210 = scalar_lea.sflag [#allocation3], %s209
        %s211 = sand.u32 %s42, 1
        %s212 = smul.addr %s211, 32
        %s213 = scalar_lea.vmem [#allocation2], %s212
        %p214 = pneg %p55
        %p215 = pneg %p52
        %p216 = scmp.lt.s32.totalorder %s24, 0
        %s217 = scalar_select %p216, %s24, 0
        %s218 = smul.addr %s217, 8
        %s219 = scalar_lea.vmem %s1, %s218
        %p220 = pneg %p81
        %p221 = pneg %p78
        %p222 = scmp.lt.s32.totalorder %s24, 0
        %s223 = scalar_select %p222, %s24, 0
        %s224 = smul.addr %s223, 8
        %s225 = scalar_lea.vmem %s2, %s224
        %p226 = pneg %p107
        %p227 = pneg %p104
        %p228 = pneg %p135
        %p229 = pneg %p132
        %s230 = sand.u32 %s122, 1
        %s231 = scalar_lea.sflag [#allocation4], %s230
        %s232 = sand.u32 %s122, 1
        %s233 = smul.addr %s232, 32
        %s234 = scalar_lea.vmem [#allocation5], %s233
        %s235 = smul.u32 8, %s24
        %p236 = scmp.lt.s32.totalorder %s24, 0
        %s237 = scalar_select %p236, %s24, 0
        %s238 = smul.addr %s237, 8
        %s239 = scalar_lea.vmem %s1, %s238
        %p240 = scmp.lt.s32.totalorder %s24, 0
        %s241 = scalar_select %p240, %s24, 0
        %s242 = smul.addr %s241, 8
        %s243 = scalar_lea.vmem %s2, %s242
        %s244 = smul.u32 8, %s24
        %v245 = vld [vmem:[%s203] sm:$0xf]
        %v246 = vld [vmem:[%s203 + $0x4] sm:$0xf]
        %v247 = vld [vmem:[%s203 + $0x8] sm:$0xf]
        %v248 = vld [vmem:[%s203 + $0xc] sm:$0xf]
        %v249 = vld [vmem:[%s203 + $0x10] sm:$0xf]
        %v250 = vld [vmem:[%s203 + $0x14] sm:$0xf]
        %v251 = vld [vmem:[%s203 + $0x18] sm:$0xf]
        %v252 = vld [vmem:[%s203 + $0x1c] sm:$0xf]
        %v253 = vld [vmem:[%s239] sm:$0xff]
        %v255 = vrot.slane %v253, 1
        %v256 = vrot.slane %v253, 2
        %v257 = vrot.slane %v253, 3
        %v258 = vrot.slane %v253, 4
        %v259 = vrot.slane %v253, 5
        %v260 = vrot.slane %v253, 6
        %v261 = vrot.slane %v253, 7
        %v262 = vld [vmem:[%s243] sm:$0xff]
        %v264 = vrot.slane %v262, 1
        %v265 = vrot.slane %v262, 2
        %v266 = vrot.slane %v262, 3
        %v267 = vrot.slane %v262, 4
        %v268 = vrot.slane %v262, 5
        %v269 = vrot.slane %v262, 6
        %v270 = vrot.slane %v262, 7
        %v271 = vperm.slane %v253, 0
        %v272 = vperm.slane %v255, 0
        %v273 = vperm.slane %v256, 0
        %v274 = vperm.slane %v257, 0
        %v275 = vperm.slane %v258, 0
        %v276 = vperm.slane %v259, 0
        %v277 = vperm.slane %v260, 0
        %v278 = vperm.slane %v261, 0
        %v287 = vmul.f32 %v245, %v271
        %v288 = vmul.f32 %v246, %v272
        %v289 = vmul.f32 %v247, %v273
        %v290 = vmul.f32 %v248, %v274
        %v291 = vmul.f32 %v249, %v275
        %v292 = vmul.f32 %v250, %v276
        %v293 = vmul.f32 %v251, %v277
        %v294 = vmul.f32 %v252, %v278
        %v295 = vperm.slane %v262, 0
        %v296 = vperm.slane %v264, 0
        %v297 = vperm.slane %v265, 0
        %v298 = vperm.slane %v266, 0
        %v299 = vperm.slane %v267, 0
        %v300 = vperm.slane %v268, 0
        %v301 = vperm.slane %v269, 0
        %v302 = vperm.slane %v270, 0
        %311 = vrot.lane.b32.xlu0 %v295, 4
        %v312 = vpop.permute.xlu0 %311
        %313 = vrot.lane.b32.xlu0 %v296, 4
        %v314 = vpop.permute.xlu0 %313
        %315 = vrot.lane.b32.xlu0 %v297, 4
        %v316 = vpop.permute.xlu0 %315
        %317 = vrot.lane.b32.xlu0 %v298, 4
        %v318 = vpop.permute.xlu0 %317
        %319 = vrot.lane.b32.xlu0 %v299, 4
        %v320 = vpop.permute.xlu0 %319
        %321 = vrot.lane.b32.xlu0 %v300, 4
        %v322 = vpop.permute.xlu0 %321
        %323 = vrot.lane.b32.xlu0 %v301, 4
        %v324 = vpop.permute.xlu0 %323
        %325 = vrot.lane.b32.xlu0 %v302, 4
        %v326 = vpop.permute.xlu0 %325
        %v335 = vmul.f32 %v245, %v312
        %v336 = vmul.f32 %v246, %v314
        %v337 = vmul.f32 %v247, %v316
        %v338 = vmul.f32 %v248, %v318
        %v339 = vmul.f32 %v249, %v320
        %v340 = vmul.f32 %v250, %v322
        %v341 = vmul.f32 %v251, %v324
        %v342 = vmul.f32 %v252, %v326
        %351 = vrot.lane.b32.xlu0 %v335, 124
        %v352 = vpop.permute.xlu0 %351
        %353 = vrot.lane.b32.xlu0 %v336, 124
        %v354 = vpop.permute.xlu0 %353
        %355 = vrot.lane.b32.xlu0 %v337, 124
        %v356 = vpop.permute.xlu0 %355
        %357 = vrot.lane.b32.xlu0 %v338, 124
        %v358 = vpop.permute.xlu0 %357
        %359 = vrot.lane.b32.xlu0 %v339, 124
        %v360 = vpop.permute.xlu0 %359
        %361 = vrot.lane.b32.xlu0 %v340, 124
        %v362 = vpop.permute.xlu0 %361
        %363 = vrot.lane.b32.xlu0 %v341, 124
        %v364 = vpop.permute.xlu0 %363
        %365 = vrot.lane.b32.xlu0 %v342, 124
        %v366 = vpop.permute.xlu0 %365
        %v375 = vadd.f32 %v287, %v352
        %v376 = vadd.f32 %v288, %v354
        %v377 = vadd.f32 %v289, %v356
        %v378 = vadd.f32 %v290, %v358
        %v379 = vadd.f32 %v291, %v360
        %v380 = vadd.f32 %v292, %v362
        %v381 = vadd.f32 %v293, %v364
        %v382 = vadd.f32 %v294, %v366
        %vm383 = vcmask 27648
        %384 = vst.msk [vmem:[%s234] sm:$0xf] %vm383, %v375
        %385 = vst.msk [vmem:[%s234 + $0x4] sm:$0xf] %vm383, %v376
        %386 = vst.msk [vmem:[%s234 + $0x8] sm:$0xf] %vm383, %v377
        %387 = vst.msk [vmem:[%s234 + $0xc] sm:$0xf] %vm383, %v378
        %388 = vst.msk [vmem:[%s234 + $0x10] sm:$0xf] %vm383, %v379
        %389 = vst.msk [vmem:[%s234 + $0x14] sm:$0xf] %vm383, %v380
        %390 = vst.msk [vmem:[%s234 + $0x18] sm:$0xf] %vm383, %v381
        %391 = vst.msk [vmem:[%s234 + $0x1c] sm:$0xf] %vm383, %v382
        %392 = vrot.lane.b32.xlu0 %v271, 4
        %v393 = vpop.permute.xlu0 %392
        %394 = vrot.lane.b32.xlu0 %v272, 4
        %v395 = vpop.permute.xlu0 %394
        %396 = vrot.lane.b32.xlu0 %v273, 4
        %v397 = vpop.permute.xlu0 %396
        %398 = vrot.lane.b32.xlu0 %v274, 4
        %v399 = vpop.permute.xlu0 %398
        %400 = vrot.lane.b32.xlu0 %v275, 4
        %v401 = vpop.permute.xlu0 %400
        %402 = vrot.lane.b32.xlu0 %v276, 4
        %v403 = vpop.permute.xlu0 %402
        %404 = vrot.lane.b32.xlu0 %v277, 4
        %v405 = vpop.permute.xlu0 %404
        %406 = vrot.lane.b32.xlu0 %v278, 4
        %v407 = vpop.permute.xlu0 %406
        %v416 = vmul.f32 %v245, %v393
        %v417 = vmul.f32 %v246, %v395
        %v418 = vmul.f32 %v247, %v397
        %v419 = vmul.f32 %v248, %v399
        %v420 = vmul.f32 %v249, %v401
        %v421 = vmul.f32 %v250, %v403
        %v422 = vmul.f32 %v251, %v405
        %v423 = vmul.f32 %v252, %v407
        %v424 = vmul.f32 %v245, %v295
        %v425 = vmul.f32 %v246, %v296
        %v426 = vmul.f32 %v247, %v297
        %v427 = vmul.f32 %v248, %v298
        %v428 = vmul.f32 %v249, %v299
        %v429 = vmul.f32 %v250, %v300
        %v430 = vmul.f32 %v251, %v301
        %v431 = vmul.f32 %v252, %v302
        %440 = vrot.lane.b32.xlu0 %v424, 4
        %v441 = vpop.permute.xlu0 %440
        %442 = vrot.lane.b32.xlu0 %v425, 4
        %v443 = vpop.permute.xlu0 %442
        %444 = vrot.lane.b32.xlu0 %v426, 4
        %v445 = vpop.permute.xlu0 %444
        %446 = vrot.lane.b32.xlu0 %v427, 4
        %v447 = vpop.permute.xlu0 %446
        %448 = vrot.lane.b32.xlu0 %v428, 4
        %v449 = vpop.permute.xlu0 %448
        %450 = vrot.lane.b32.xlu0 %v429, 4
        %v451 = vpop.permute.xlu0 %450
        %452 = vrot.lane.b32.xlu0 %v430, 4
        %v453 = vpop.permute.xlu0 %452
        %454 = vrot.lane.b32.xlu0 %v431, 4
        %v455 = vpop.permute.xlu0 %454
        %v464 = vsub.f32 %v416, %v441
        %v465 = vsub.f32 %v417, %v443
        %v466 = vsub.f32 %v418, %v445
        %v467 = vsub.f32 %v419, %v447
        %v468 = vsub.f32 %v420, %v449
        %v469 = vsub.f32 %v421, %v451
        %v470 = vsub.f32 %v422, %v453
        %v471 = vsub.f32 %v423, %v455
        %vm472 = vcmask 60448
        %473 = vst.msk [vmem:[%s234] sm:$0xf] %vm472, %v464
        %474 = vst.msk [vmem:[%s234 + $0x4] sm:$0xf] %vm472, %v465
        %475 = vst.msk [vmem:[%s234 + $0x8] sm:$0xf] %vm472, %v466
        %476 = vst.msk [vmem:[%s234 + $0xc] sm:$0xf] %vm472, %v467
        %477 = vst.msk [vmem:[%s234 + $0x10] sm:$0xf] %vm472, %v468
        %478 = vst.msk [vmem:[%s234 + $0x14] sm:$0xf] %vm472, %v469
        %479 = vst.msk [vmem:[%s234 + $0x18] sm:$0xf] %vm472, %v470
        %480 = vst.msk [vmem:[%s234 + $0x1c] sm:$0xf] %vm472, %v471
        %s481 = sand.u32 %s122, 1
        %s482 = scalar_lea.sflag [#allocation4], %s481
        %s483 = sand.u32 %s122, 1
        %s484 = smul.addr %s483, 32
        %s485 = scalar_lea.vmem [#allocation5], %s484
        // Predicated region
        $region37: #{tpu_custom_call.1} parent=31 // pred_check
          %p486 = pneg %p132
        $region38: #{tpu_custom_call.1} parent=31 // pred_check_branch
          %488 = sbr.rel (%p486) target = $region40
        $region39: #{tpu_custom_call.1} parent=31 // pred_region
          %s489 = smul.u32 8, %s24
          %491 = vsyncadd %s482, 0
          %s492 = smul.addr %s25, 8
          %s493 = sadd.s32 %s489, %s492
          %s494 = smul.addr %s493, 4
          %s495 = scalar_lea.hbm %s3, %s494
          %s496 = sshll.u32 %s485, 4
          %s497 = int_to_ptr.vmem [resolvable:$true] %s496
          %s498 = sshll.u32 %s495, 4
          %s499 = int_to_ptr.hbm [resolvable:$true] %s498
          %504 = dma.vmem_to_hbm [thread:$0]  %s497, 512, %s499, %s482, 64, 64, 4
        $region40: #{tpu_custom_call.1} parent=31 // pred_fallthru
          _
      $region32: #{tpu_custom_call.1} parent=5 // pred_fallthru
        _
      %p505 = scmp.le.s32.totalorder 2, %s15
      // Predicated region
      $region41: #{tpu_custom_call.1} parent=5 // pred_check
        %p506 = pneg %p505
      $region42: #{tpu_custom_call.1} parent=5 // pred_check_branch
        %508 = sbr.rel (%p506) target = $region44
      $region43: #{tpu_custom_call.1} parent=5 // pred_region
        %s509 = ssub.s32 %s15, 2
        // Predicated region
        $region45: #{tpu_custom_call.1} parent=43 // pred_check
          %p510 = pneg %p138
        $region46: #{tpu_custom_call.1} parent=43 // pred_check_branch
          %512 = sbr.rel (%p510) target = $region48
        $region47: #{tpu_custom_call.1} parent=43 // pred_region
          %s513 = sand.u32 %s123, 1
          %s514 = scalar_lea.sflag [#allocation4], %s513
          %s515 = sand.u32 %s123, 1
          %s516 = smul.addr %s515, 32
          %s517 = scalar_lea.vmem [#allocation5], %s516
          %519 = dma.done %s514, 512
        $region48: #{tpu_custom_call.1} parent=43 // pred_fallthru
          _
      $region44: #{tpu_custom_call.1} parent=5 // pred_fallthru
        _
    $region6: #{tpu_custom_call.1} parent=1 // loop_footer
      %s19 = sadd.s32 1, %s15
    $region7: #{tpu_custom_call.1} parent=1 // loop_footer_branch
      %14 = sbr.rel target = $region3
    $region8: #{tpu_custom_call.1} parent=1 // loop_exit
      _
    %520 = vsyncpa [#allocation3], 1
    %s521 = scalar_lea.sflag [#allocation3], 1
    %522 = vsyncpa %s521, 1
    %523 = vsyncpa [#allocation4], 1
    %s524 = scalar_lea.sflag [#allocation4], 1
    %525 = vsyncpa %s524, 1

</llo_original>
